<compile_context>
chip_gen: v7x
topology: tpu7x:2x2x1
jax: 0.10.0
libtpu: 0.0.40
codegen_flags: <defaults>
</compile_context>

<pallas_src>
import jax
import jax.numpy as jnp
from jax.experimental import pallas as pl
from jax.experimental.pallas import tpu as pltpu

_LANE = 128                              # full vreg lane width -> unmasked stores
_TARGET_BLOCK_BYTES = 4 * 1024 * 1024    # ~4 MiB per block; 4x live buffers = 16 MiB < 32 MiB scoped VMEM (v7x-safe)
_SUBLANE_QUANTUM = 32                    # legal packed sublane tile for f32 / bf16 / int8 / fp8


def _copy_kernel(x_ref, o_ref):
    # Pure passthrough: one full-tile load + one full, lane-dense tile store.
    o_ref[...] = x_ref[...]


def _round_up(x, m):
    return ((x + m - 1) // m) * m


def jpeg_compression(encoded_and_cover):
    """Pallas equivalent of JpegCompression.forward.

    encoded_and_cover: sequence whose first element is the encoded image
    (any shape / dtype).  Returns the encoded image unchanged.
    """
    encoded = encoded_and_cover[0]
    orig_shape = encoded.shape
    dtype = encoded.dtype
    itemsize = jnp.dtype(dtype).itemsize

    # --- wrapper-side layout plumbing: lane-dense 2-D view --------------------
    flat = encoded.reshape(-1)
    n = flat.shape[0]

    # Only pad when n is not a multiple of 128 (rare for image tensors; the
    # example shapes divide evenly, so no extra HBM traffic is paid here).
    pad = (-n) % _LANE
    if pad:
        flat = jnp.pad(flat, (0, pad))
    rows = flat.shape[0] // _LANE
    x2d = flat.reshape(rows, _LANE)

    if rows <= _SUBLANE_QUANTUM:
        # Tiny input: a single full-extent block (always a legal block shape).
        row_block = rows
    else:
        # Big blocks (~4 MiB) amortize the ~0.35 us per-grid-step overhead.
        row_block = _TARGET_BLOCK_BYTES // (_LANE * itemsize)
        row_block = max(_SUBLANE_QUANTUM, _round_up(row_block, _SUBLANE_QUANTUM))
        # Keep grid length >= 2 so both v7x TensorCores get work (no-op on
        # single-TC v5e / v6e).
        half = _round_up(pl.cdiv(rows, 2), _SUBLANE_QUANTUM)
        row_block = min(row_block, half)

    grid = (pl.cdiv(rows, row_block),)

    out2d = pl.pallas_call(
        _copy_kernel,
        out_shape=jax.ShapeDtypeStruct((rows, _LANE), dtype),
        grid=grid,
        in_specs=[pl.BlockSpec((row_block, _LANE), lambda i: (i, 0))],
        out_specs=pl.BlockSpec((row_block, _LANE), lambda i: (i, 0)),
        compiler_params=pltpu.CompilerParams(
            dimension_semantics=("parallel",),       # 2-TC sharding on v7x
            vmem_limit_bytes=32 * 1024 * 1024,
        ),
        cost_estimate=pl.CostEstimate(
            flops=0,
            transcendentals=0,
            bytes_accessed=2 * n * itemsize,         # read + write, purely HBM-bound
        ),
    )(x2d)

    out_flat = out2d.reshape(-1)
    if pad:
        out_flat = out_flat[:n]
    return out_flat.reshape(orig_shape)


def _reference(encoded_and_cover):
    """Pure-JAX transcription of the PyTorch forward."""
    return encoded_and_cover[0]


if __name__ == "__main__":
    key = jax.random.PRNGKey(0)
    k_enc, k_cov = jax.random.split(key)

    # Small shapes consistent with the module: a batch of encoded RGB images
    # plus the cover images the forward ignores.
    B, C, H, W = 2, 3, 16, 16
    encoded_image = jax.random.normal(k_enc, (B, C, H, W), dtype=jnp.float32)
    cover_image = jax.random.normal(k_cov, (B, C, H, W), dtype=jnp.float32)
    encoded_and_cover = (encoded_image, cover_image)

    out = jpeg_compression(encoded_and_cover)
    jax.block_until_ready(out)

    ref = _reference(encoded_and_cover)
    assert out.shape == ref.shape and out.dtype == ref.dtype
    assert bool(jnp.array_equal(out, ref)), "Pallas kernel mismatch vs reference"
    print("KERNEL_OK")
</pallas_src>

<mosaic_0001>
module attributes {stable_mosaic.version = 11 : i64} {
  func.func @_copy_kernel(%arg0: i32, %arg1: memref<12x128xf32, #tpu.memory_space<vmem>>, %arg2: memref<12x128xf32, #tpu.memory_space<vmem>>) attributes {dimension_semantics = [#tpu.dimension_semantics<parallel>], iteration_bounds = array<i64: 1>, scalar_prefetch = 0 : i64, scratch_operands = 0 : i64, tpu.core_type = #tpu.core_type<tc>, window_params = [{transform_indices = @transform_0, window_bounds = array<i64: 12, 128>}, {transform_indices = @transform_1, window_bounds = array<i64: 12, 128>}]} {
    %c0 = arith.constant 0 : index
    %c0_0 = arith.constant 0 : index
    %0 = vector.load %arg1[%c0, %c0_0] : memref<12x128xf32, #tpu.memory_space<vmem>>, vector<12x128xf32>
    %c0_1 = arith.constant 0 : index
    %c0_2 = arith.constant 0 : index
    %1 = vector.load %arg2[%c0_1, %c0_2] : memref<12x128xf32, #tpu.memory_space<vmem>>, vector<12x128xf32>
    tpu.vector_store %arg2[%c0_1, %c0_2], %0 {strides = array<i32>} : memref<12x128xf32, #tpu.memory_space<vmem>>, vector<12x128xf32>,
    return
  }
  func.func @transform_0(%arg0: i32) -> (i32, i32) {
    %c0_i32 = arith.constant 0 : i32
    %c0_i32_0 = arith.constant 0 : i32
    return %arg0, %c0_i32 : i32, i32
  }
  func.func @transform_1(%arg0: i32) -> (i32, i32) {
    %c0_i32 = arith.constant 0 : i32
    %c0_i32_0 = arith.constant 0 : i32
    return %arg0, %c0_i32 : i32, i32
  }
}

</mosaic_0001>

<llo_original>
// kernel: tpu_custom_call.1
$region0: #{tpu_custom_call.1}
  #allocation0 [shape = 'u32[]', space=smem, size = 0x4, offset = 0x4, fixed_abs, tag = 'smem constant byte address 0x4 - core index']
  #allocation1 [shape = 'u32[144,128]{1,0:T(1,128)}', space=vmem, size = 0x12000, scoped, tag = 'internal scratch']
  %s0 = inlined_call_operand.hbm [shape: f32[12,128], index: 0, kind: input, shape index: {}]
  %s1 = inlined_call_operand.hbm [shape: f32[12,128], index: 1, kind: output, shape index: {}]
  %s2 = sld [smem:[#allocation0]]
  $region18: #{tpu_custom_call.1} parent=0
    _
  %s4 = ssub.s32 1, %s2
  %s5 = scalar_select 0, %s4, %s2
  $region1: #{tpu_custom_call.1} parent=0
    #allocation2 [shape = 'u8[8192]{0}', space=vmem, size = 0x2000, scoped, tag = 'input window, operand 0, single buffered']
    #allocation3 [shape = 's32[1]{0}', space=sflag, size = 0x4, scoped, tag = 'scoped memory for tpu_custom_call.1']
    #allocation4 [shape = 's32[1]{0}', space=sflag, size = 0x4, scoped, tag = 'scoped memory for tpu_custom_call.1']
    #allocation5 [shape = 'u8[8192]{0}', space=vmem, size = 0x2000, scoped, tag = 'output window, operand 0, single buffered']
    %6 = vsyncpa [#allocation3], 0
    %7 = vsyncpa [#allocation4], 0
    // Predicated region
    $region2: #{tpu_custom_call.1} parent=1 // pred_check
      _
    $region3: #{tpu_custom_call.1} parent=1 // pred_check_branch
      %9 = sbr.rel (0) target = $region5
    $region4: #{tpu_custom_call.1} parent=1 // pred_region
      %s11 = ssub.s32 256, 256
      %12 = vsyncadd [#allocation3], %s11
      %s13 = sshll.u32 [#allocation2], 4
      %s14 = int_to_ptr.vmem [resolvable:$true] %s13
      %19 = dma.hbm_to_vmem [thread:$0]  %s0, 256, %s14, [#allocation3], 128, 128, 8
    $region5: #{tpu_custom_call.1} parent=1 // pred_fallthru
      _
    // Predicated region
    $region6: #{tpu_custom_call.1} parent=1 // pred_check
      _
    $region7: #{tpu_custom_call.1} parent=1 // pred_check_branch
      %21 = sbr.rel (0) target = $region9
    $region8: #{tpu_custom_call.1} parent=1 // pred_region
      %22 = dma.done [#allocation3], 256
    $region9: #{tpu_custom_call.1} parent=1 // pred_fallthru
      _
    %v23 = vld [vmem:[#allocation2] sm:$0xff]
    %v24 = vld [vmem:[#allocation2 + $0x8] sm:$0xf]
    %25 = vst [vmem:[#allocation5] sm:$0xff] %v23
    %26 = vst [vmem:[#allocation5 + $0x8] sm:$0xf] %v24
    // Predicated region
    $region10: #{tpu_custom_call.1} parent=1 // pred_check
      _
    $region11: #{tpu_custom_call.1} parent=1 // pred_check_branch
      %28 = sbr.rel (0) target = $region13
    $region12: #{tpu_custom_call.1} parent=1 // pred_region
      %s30 = ssub.s32 256, 256
      %31 = vsyncadd [#allocation4], %s30
      %s32 = sshll.u32 [#allocation5], 4
      %s33 = int_to_ptr.vmem [resolvable:$true] %s32
      %38 = dma.vmem_to_hbm [thread:$0]  %s33, 256, %s1, [#allocation4], 128, 128, 8
    $region13: #{tpu_custom_call.1} parent=1 // pred_fallthru
      _
    // Predicated region
    $region14: #{tpu_custom_call.1} parent=1 // pred_check
      _
    $region15: #{tpu_custom_call.1} parent=1 // pred_check_branch
      %40 = sbr.rel (0) target = $region17
    $region16: #{tpu_custom_call.1} parent=1 // pred_region
      %41 = dma.done [#allocation4], 256
    $region17: #{tpu_custom_call.1} parent=1 // pred_fallthru
      _
    %42 = vsyncpa [#allocation3], 1
    %43 = vsyncpa [#allocation4], 1

</llo_original>
